<compile_context>
chip_gen: v7x
topology: tpu7x:2x2x1
jax: 0.10.0
libtpu: 0.0.40
codegen_flags: <defaults>
</compile_context>

<pallas_src>
import math

import jax
import jax.numpy as jnp
from jax.experimental import pallas as pl
from jax.experimental.pallas import tpu as pltpu

LANE = 128      # vreg lane width  -> last-dim padding target
SUBLANE = 8     # vreg sublane count -> batch-tile granularity


def _round_up(x: int, m: int) -> int:
    return ((x + m - 1) // m) * m


def _sigmoid(x):
    # exp -> EUP, approx reciprocal -> EUP; keeps VALU slots free for filler work.
    return pl.reciprocal(1.0 + jnp.exp(-x), approx=True)


def conditional_mlp_kernel(x_ref, c_ref,
                           w1_ref, b1_ref,   # pre_layers[0]:  Linear(in, 4n)
                           w2_ref, b2_ref,   # pre_layers[2]:  Linear(4n, 4n)
                           we_ref, be_ref,   # emb_layers[1]:  Linear(4n, 4n)
                           w3_ref, b3_ref,   # post_layers[1]: Linear(4n, 4n)
                           w4_ref, b4_ref,   # post_layers[3]: Linear(4n, out)
                           o_ref):
    # Activation tiles arrive as bf16; matmuls run bf16 x bf16 -> f32 on the MXU.
    x = x_ref[...]
    c = c_ref[...]

    # Hoist the small f32 bias rows once.
    b1 = b1_ref[...]
    b2 = b2_ref[...]
    be = be_ref[...]
    b3 = b3_ref[...]
    b4 = b4_ref[...]

    # pre_layers: Linear -> Sigmoid -> Linear
    h = jnp.dot(x, w1_ref[...], preferred_element_type=jnp.float32) + b1
    h = _sigmoid(h)
    h = jnp.dot(h.astype(jnp.bfloat16), w2_ref[...],
                preferred_element_type=jnp.float32) + b2

    # emb_layers: SiLU -> Linear (SiLU in f32 for accuracy)
    cf = c.astype(jnp.float32)
    cs = cf * _sigmoid(cf)
    ce = jnp.dot(cs.astype(jnp.bfloat16), we_ref[...],
                 preferred_element_type=jnp.float32) + be

    # x = x + condition
    h = h + ce

    # post_layers: Sigmoid -> Linear -> Sigmoid -> Linear
    h = _sigmoid(h)
    h = jnp.dot(h.astype(jnp.bfloat16), w3_ref[...],
                preferred_element_type=jnp.float32) + b3
    h = _sigmoid(h)
    out = jnp.dot(h.astype(jnp.bfloat16), w4_ref[...],
                  preferred_element_type=jnp.float32) + b4

    o_ref[...] = out.astype(o_ref.dtype)


def init_params(key, in_features: int, out_features: int):
    """PyTorch-style nn.Linear init (U[-1/sqrt(fan_in), 1/sqrt(fan_in)]), f32.

    Weights are stored transposed to [fan_in, fan_out]; biases as [1, fan_out].
    """
    n = max(in_features, out_features)
    hidden = 4 * n

    def linear(k, fan_in, fan_out):
        kw, kb = jax.random.split(k)
        bound = 1.0 / math.sqrt(fan_in)
        w = jax.random.uniform(kw, (fan_in, fan_out), jnp.float32, -bound, bound)
        b = jax.random.uniform(kb, (1, fan_out), jnp.float32, -bound, bound)
        return w, b

    k1, k2, ke, k3, k4 = jax.random.split(key, 5)
    w1, b1 = linear(k1, in_features, hidden)   # pre_layers[0]
    w2, b2 = linear(k2, hidden, hidden)        # pre_layers[2]
    we, be = linear(ke, hidden, hidden)        # emb_layers[1]
    w3, b3 = linear(k3, hidden, hidden)        # post_layers[1]
    w4, b4 = linear(k4, hidden, out_features)  # post_layers[3]
    return (w1, b1, w2, b2, we, be, w3, b3, w4, b4)


def pack_params(params):
    """Pad every feature dim to a multiple of 128 lanes; weights -> bf16, biases f32.

    Zero-padded weight rows/columns and zero bias padding keep the math exact
    (padded activation columns never contribute to valid output columns).
    """
    (w1, b1, w2, b2, we, be, w3, b3, w4, b4) = params
    in_f, hidden = w1.shape
    out_f = w4.shape[1]
    in_p = _round_up(in_f, LANE)
    h_p = _round_up(hidden, LANE)
    out_p = _round_up(out_f, LANE)

    def pad_w(w, rows, cols):
        buf = jnp.zeros((rows, cols), jnp.float32)
        return buf.at[:w.shape[0], :w.shape[1]].set(w).astype(jnp.bfloat16)

    def pad_b(b, cols):
        return jnp.zeros((1, cols), jnp.float32).at[:, :b.shape[1]].set(b)

    return (pad_w(w1, in_p, h_p), pad_b(b1, h_p),
            pad_w(w2, h_p, h_p), pad_b(b2, h_p),
            pad_w(we, h_p, h_p), pad_b(be, h_p),
            pad_w(w3, h_p, h_p), pad_b(b3, h_p),
            pad_w(w4, h_p, out_p), pad_b(b4, out_p))


def conditional_mlp(x, condition, packed_params, out_features: int,
                    *, block_batch: int = 512):
    (w1, b1, w2, b2, we, be, w3, b3, w4, b4) = packed_params
    in_p, h_p = w1.shape
    out_p = w4.shape[1]
    batch = x.shape[0]

    # Batch tile: multiple of 8 sublanes, large enough to feed the MXU M-dim.
    tb = min(_round_up(block_batch, SUBLANE), _round_up(batch, SUBLANE))
    pb = _round_up(batch, tb)
    grid = (pb // tb,)

    # Zero-pad activations to (pb, lane-multiple). Padded columns hit zero weight
    # rows, padded batch rows are sliced off below.
    xp = jnp.zeros((pb, in_p), jnp.bfloat16)
    xp = xp.at[:batch, :x.shape[1]].set(x.astype(jnp.bfloat16))
    cp = jnp.zeros((pb, h_p), jnp.bfloat16)
    cp = cp.at[:batch, :condition.shape[1]].set(condition.astype(jnp.bfloat16))

    def act_spec(cols):
        return pl.BlockSpec((tb, cols), lambda i: (i, 0))

    def resident_spec(shape):
        return pl.BlockSpec(shape, lambda i: (0, 0))   # stays in VMEM across grid

    flops = 2 * pb * (in_p * h_p + 3 * h_p * h_p + h_p * out_p)
    transcendentals = 4 * pb * h_p
    bytes_accessed = (
        (xp.size + cp.size) * 2 + pb * out_p * 4
        + sum(w.size * 2 for w in (w1, w2, we, w3, w4))
        + sum(b.size * 4 for b in (b1, b2, be, b3, b4))
    )

    out_padded = pl.pallas_call(
        conditional_mlp_kernel,
        out_shape=jax.ShapeDtypeStruct((pb, out_p), jnp.float32),
        grid_spec=pltpu.PrefetchScalarGridSpec(
            num_scalar_prefetch=0,
            grid=grid,
            in_specs=[
                act_spec(in_p),                                   # x tile
                act_spec(h_p),                                    # condition tile
                resident_spec((in_p, h_p)), resident_spec((1, h_p)),   # w1, b1
                resident_spec((h_p, h_p)), resident_spec((1, h_p)),    # w2, b2
                resident_spec((h_p, h_p)), resident_spec((1, h_p)),    # we, be
                resident_spec((h_p, h_p)), resident_spec((1, h_p)),    # w3, b3
                resident_spec((h_p, out_p)), resident_spec((1, out_p)),  # w4, b4
            ],
            out_specs=pl.BlockSpec((tb, out_p), lambda i: (i, 0)),
        ),
        compiler_params=pltpu.CompilerParams(
            dimension_semantics=("parallel",),          # v7x: shard batch over 2 TCs
            vmem_limit_bytes=48 * 1024 * 1024,          # headroom, < 64 MiB v7x VMEM
        ),
        cost_estimate=pl.CostEstimate(
            flops=flops,
            transcendentals=transcendentals,
            bytes_accessed=bytes_accessed,
        ),
    )(xp, cp, w1, b1, w2, b2, we, be, w3, b3, w4, b4)

    return out_padded[:batch, :out_features]


def conditional_mlp_ref(x, condition, params):
    """Pure-JAX f32 reference (unpadded params) for correctness checking."""
    (w1, b1, w2, b2, we, be, w3, b3, w4, b4) = params
    sig = lambda t: 1.0 / (1.0 + jnp.exp(-t))
    h = x @ w1 + b1
    h = sig(h)
    h = h @ w2 + b2
    c = condition * sig(condition)
    c = c @ we + be
    h = h + c
    h = sig(h)
    h = h @ w3 + b3
    h = sig(h)
    return h @ w4 + b4


if __name__ == "__main__":
    in_features = 8
    out_features = 8
    batch = 8
    n = max(in_features, out_features)
    hidden = 4 * n  # 32

    key = jax.random.PRNGKey(0)
    kp, kx, kc = jax.random.split(key, 3)
    params = init_params(kp, in_features, out_features)
    packed = pack_params(params)

    x = jax.random.normal(kx, (batch, in_features), jnp.float32)
    condition = jax.random.normal(kc, (batch, hidden), jnp.float32)

    out = conditional_mlp(x, condition, packed, out_features)
    out = jax.block_until_ready(out)

    ref = conditional_mlp_ref(x, condition, params)
    assert out.shape == (batch, out_features)
    # bf16 matmul inputs + approx reciprocal -> loosened tolerance vs f32 reference.
    assert jnp.allclose(out, ref, atol=3e-2, rtol=3e-2), (
        f"mismatch vs reference: max abs err = {jnp.max(jnp.abs(out - ref))}")

    print("KERNEL_OK")
</pallas_src>

<mosaic_0001>
module attributes {stable_mosaic.version = 11 : i64} {
  func.func @conditional_mlp_kernel(%arg0: i32, %arg1: memref<8x128xbf16, #tpu.memory_space<vmem>>, %arg2: memref<8x128xbf16, #tpu.memory_space<vmem>>, %arg3: memref<128x128xbf16, #tpu.memory_space<vmem>>, %arg4: memref<1x128xf32, #tpu.memory_space<vmem>>, %arg5: memref<128x128xbf16, #tpu.memory_space<vmem>>, %arg6: memref<1x128xf32, #tpu.memory_space<vmem>>, %arg7: memref<128x128xbf16, #tpu.memory_space<vmem>>, %arg8: memref<1x128xf32, #tpu.memory_space<vmem>>, %arg9: memref<128x128xbf16, #tpu.memory_space<vmem>>, %arg10: memref<1x128xf32, #tpu.memory_space<vmem>>, %arg11: memref<128x128xbf16, #tpu.memory_space<vmem>>, %arg12: memref<1x128xf32, #tpu.memory_space<vmem>>, %arg13: memref<8x128xf32, #tpu.memory_space<vmem>>) attributes {dimension_semantics = [#tpu.dimension_semantics<parallel>], iteration_bounds = array<i64: 1>, scalar_prefetch = 0 : i64, scratch_operands = 0 : i64, tpu.core_type = #tpu.core_type<tc>, window_params = [{transform_indices = @transform_0, window_bounds = array<i64: 8, 128>}, {transform_indices = @transform_1, window_bounds = array<i64: 8, 128>}, {pipeline_mode = #tpu.pipeline_mode<synchronous>, transform_indices = @transform_2, window_bounds = array<i64: 128, 128>}, {pipeline_mode = #tpu.pipeline_mode<synchronous>, transform_indices = @transform_3, window_bounds = array<i64: 1, 128>}, {pipeline_mode = #tpu.pipeline_mode<synchronous>, transform_indices = @transform_4, window_bounds = array<i64: 128, 128>}, {pipeline_mode = #tpu.pipeline_mode<synchronous>, transform_indices = @transform_5, window_bounds = array<i64: 1, 128>}, {pipeline_mode = #tpu.pipeline_mode<synchronous>, transform_indices = @transform_6, window_bounds = array<i64: 128, 128>}, {pipeline_mode = #tpu.pipeline_mode<synchronous>, transform_indices = @transform_7, window_bounds = array<i64: 1, 128>}, {pipeline_mode = #tpu.pipeline_mode<synchronous>, transform_indices = @transform_8, window_bounds = array<i64: 128, 128>}, {pipeline_mode = #tpu.pipeline_mode<synchronous>, transform_indices = @transform_9, window_bounds = array<i64: 1, 128>}, {pipeline_mode = #tpu.pipeline_mode<synchronous>, transform_indices = @transform_10, window_bounds = array<i64: 128, 128>}, {pipeline_mode = #tpu.pipeline_mode<synchronous>, transform_indices = @transform_11, window_bounds = array<i64: 1, 128>}, {transform_indices = @transform_12, window_bounds = array<i64: 8, 128>}]} {
    %c0 = arith.constant 0 : index
    %c0_0 = arith.constant 0 : index
    %0 = vector.load %arg1[%c0, %c0_0] : memref<8x128xbf16, #tpu.memory_space<vmem>>, vector<8x128xbf16>
    %c0_1 = arith.constant 0 : index
    %c0_2 = arith.constant 0 : index
    %1 = vector.load %arg2[%c0_1, %c0_2] : memref<8x128xbf16, #tpu.memory_space<vmem>>, vector<8x128xbf16>
    %c0_3 = arith.constant 0 : index
    %c0_4 = arith.constant 0 : index
    %2 = vector.load %arg4[%c0_3, %c0_4] : memref<1x128xf32, #tpu.memory_space<vmem>>, vector<1x128xf32>
    %c0_5 = arith.constant 0 : index
    %c0_6 = arith.constant 0 : index
    %3 = vector.load %arg6[%c0_5, %c0_6] : memref<1x128xf32, #tpu.memory_space<vmem>>, vector<1x128xf32>
    %c0_7 = arith.constant 0 : index
    %c0_8 = arith.constant 0 : index
    %4 = vector.load %arg8[%c0_7, %c0_8] : memref<1x128xf32, #tpu.memory_space<vmem>>, vector<1x128xf32>
    %c0_9 = arith.constant 0 : index
    %c0_10 = arith.constant 0 : index
    %5 = vector.load %arg10[%c0_9, %c0_10] : memref<1x128xf32, #tpu.memory_space<vmem>>, vector<1x128xf32>
    %c0_11 = arith.constant 0 : index
    %c0_12 = arith.constant 0 : index
    %6 = vector.load %arg12[%c0_11, %c0_12] : memref<1x128xf32, #tpu.memory_space<vmem>>, vector<1x128xf32>
    %c0_13 = arith.constant 0 : index
    %c0_14 = arith.constant 0 : index
    %7 = vector.load %arg3[%c0_13, %c0_14] : memref<128x128xbf16, #tpu.memory_space<vmem>>, vector<128x128xbf16>
    %cst = arith.constant dense<0.000000e+00> : vector<8x128xf32>
    %8 = tpu.matmul %0, %7, %cst {dimension_numbers = #tpu.dot_dimension_numbers<[1], [0], [0], [1], [0, 0, 1, 1], [], []>} : vector<8x128xbf16>, vector<128x128xbf16>, vector<8x128xf32> -> vector<8x128xf32>
    %9 = vector.broadcast %2 : vector<1x128xf32> to vector<8x128xf32>
    %10 = arith.addf %8, %9 : vector<8x128xf32>
    %cst_15 = arith.constant 0.000000e+00 : f32
    %11 = vector.broadcast %cst_15 : f32 to vector<8x128xf32>
    %12 = arith.subf %11, %10 : vector<8x128xf32>
    %13 = math.exp %12 : vector<8x128xf32>
    %cst_16 = arith.constant 1.000000e+00 : f32
    %14 = vector.broadcast %cst_16 : f32 to vector<8x128xf32>
    %15 = arith.addf %14, %13 : vector<8x128xf32>
    %16 = tpu.reciprocal %15 {approx = true} : vector<8x128xf32> -> vector<8x128xf32>
    %17 = arith.truncf %16 : vector<8x128xf32> to vector<8x128xbf16>
    %c0_17 = arith.constant 0 : index
    %c0_18 = arith.constant 0 : index
    %18 = vector.load %arg5[%c0_17, %c0_18] : memref<128x128xbf16, #tpu.memory_space<vmem>>, vector<128x128xbf16>
    %cst_19 = arith.constant dense<0.000000e+00> : vector<8x128xf32>
    %19 = tpu.matmul %17, %18, %cst_19 {dimension_numbers = #tpu.dot_dimension_numbers<[1], [0], [0], [1], [0, 0, 1, 1], [], []>} : vector<8x128xbf16>, vector<128x128xbf16>, vector<8x128xf32> -> vector<8x128xf32>
    %20 = vector.broadcast %3 : vector<1x128xf32> to vector<8x128xf32>
    %21 = arith.addf %19, %20 : vector<8x128xf32>
    %22 = arith.extf %1 : vector<8x128xbf16> to vector<8x128xf32>
    %cst_20 = arith.constant 0.000000e+00 : f32
    %23 = vector.broadcast %cst_20 : f32 to vector<8x128xf32>
    %24 = arith.subf %23, %22 : vector<8x128xf32>
    %25 = math.exp %24 : vector<8x128xf32>
    %cst_21 = arith.constant 1.000000e+00 : f32
    %26 = vector.broadcast %cst_21 : f32 to vector<8x128xf32>
    %27 = arith.addf %26, %25 : vector<8x128xf32>
    %28 = tpu.reciprocal %27 {approx = true} : vector<8x128xf32> -> vector<8x128xf32>
    %29 = arith.mulf %22, %28 : vector<8x128xf32>
    %30 = arith.truncf %29 : vector<8x128xf32> to vector<8x128xbf16>
    %c0_22 = arith.constant 0 : index
    %c0_23 = arith.constant 0 : index
    %31 = vector.load %arg7[%c0_22, %c0_23] : memref<128x128xbf16, #tpu.memory_space<vmem>>, vector<128x128xbf16>
    %cst_24 = arith.constant dense<0.000000e+00> : vector<8x128xf32>
    %32 = tpu.matmul %30, %31, %cst_24 {dimension_numbers = #tpu.dot_dimension_numbers<[1], [0], [0], [1], [0, 0, 1, 1], [], []>} : vector<8x128xbf16>, vector<128x128xbf16>, vector<8x128xf32> -> vector<8x128xf32>
    %33 = vector.broadcast %4 : vector<1x128xf32> to vector<8x128xf32>
    %34 = arith.addf %32, %33 : vector<8x128xf32>
    %35 = arith.addf %21, %34 : vector<8x128xf32>
    %cst_25 = arith.constant 0.000000e+00 : f32
    %36 = vector.broadcast %cst_25 : f32 to vector<8x128xf32>
    %37 = arith.subf %36, %35 : vector<8x128xf32>
    %38 = math.exp %37 : vector<8x128xf32>
    %cst_26 = arith.constant 1.000000e+00 : f32
    %39 = vector.broadcast %cst_26 : f32 to vector<8x128xf32>
    %40 = arith.addf %39, %38 : vector<8x128xf32>
    %41 = tpu.reciprocal %40 {approx = true} : vector<8x128xf32> -> vector<8x128xf32>
    %42 = arith.truncf %41 : vector<8x128xf32> to vector<8x128xbf16>
    %c0_27 = arith.constant 0 : index
    %c0_28 = arith.constant 0 : index
    %43 = vector.load %arg9[%c0_27, %c0_28] : memref<128x128xbf16, #tpu.memory_space<vmem>>, vector<128x128xbf16>
    %cst_29 = arith.constant dense<0.000000e+00> : vector<8x128xf32>
    %44 = tpu.matmul %42, %43, %cst_29 {dimension_numbers = #tpu.dot_dimension_numbers<[1], [0], [0], [1], [0, 0, 1, 1], [], []>} : vector<8x128xbf16>, vector<128x128xbf16>, vector<8x128xf32> -> vector<8x128xf32>
    %45 = vector.broadcast %5 : vector<1x128xf32> to vector<8x128xf32>
    %46 = arith.addf %44, %45 : vector<8x128xf32>
    %cst_30 = arith.constant 0.000000e+00 : f32
    %47 = vector.broadcast %cst_30 : f32 to vector<8x128xf32>
    %48 = arith.subf %47, %46 : vector<8x128xf32>
    %49 = math.exp %48 : vector<8x128xf32>
    %cst_31 = arith.constant 1.000000e+00 : f32
    %50 = vector.broadcast %cst_31 : f32 to vector<8x128xf32>
    %51 = arith.addf %50, %49 : vector<8x128xf32>
    %52 = tpu.reciprocal %51 {approx = true} : vector<8x128xf32> -> vector<8x128xf32>
    %53 = arith.truncf %52 : vector<8x128xf32> to vector<8x128xbf16>
    %c0_32 = arith.constant 0 : index
    %c0_33 = arith.constant 0 : index
    %54 = vector.load %arg11[%c0_32, %c0_33] : memref<128x128xbf16, #tpu.memory_space<vmem>>, vector<128x128xbf16>
    %cst_34 = arith.constant dense<0.000000e+00> : vector<8x128xf32>
    %55 = tpu.matmul %53, %54, %cst_34 {dimension_numbers = #tpu.dot_dimension_numbers<[1], [0], [0], [1], [0, 0, 1, 1], [], []>} : vector<8x128xbf16>, vector<128x128xbf16>, vector<8x128xf32> -> vector<8x128xf32>
    %56 = vector.broadcast %6 : vector<1x128xf32> to vector<8x128xf32>
    %57 = arith.addf %55, %56 : vector<8x128xf32>
    %c0_35 = arith.constant 0 : index
    %c0_36 = arith.constant 0 : index
    %58 = vector.load %arg13[%c0_35, %c0_36] : memref<8x128xf32, #tpu.memory_space<vmem>>, vector<8x128xf32>
    tpu.vector_store %arg13[%c0_35, %c0_36], %57 {strides = array<i32>} : memref<8x128xf32, #tpu.memory_space<vmem>>, vector<8x128xf32>,
    return
  }
  func.func @transform_0(%arg0: i32) -> (i32, i32) {
    %c0_i32 = arith.constant 0 : i32
    %c0_i32_0 = arith.constant 0 : i32
    return %arg0, %c0_i32 : i32, i32
  }
  func.func @transform_1(%arg0: i32) -> (i32, i32) {
    %c0_i32 = arith.constant 0 : i32
    %c0_i32_0 = arith.constant 0 : i32
    return %arg0, %c0_i32 : i32, i32
  }
  func.func @transform_2(%arg0: i32) -> (i32, i32) {
    %c0_i32 = arith.constant 0 : i32
    %c0_i32_0 = arith.constant 0 : i32
    %c0_i32_1 = arith.constant 0 : i32
    return %c0_i32, %c0_i32_0 : i32, i32
  }
  func.func @transform_3(%arg0: i32) -> (i32, i32) {
    %c0_i32 = arith.constant 0 : i32
    %c0_i32_0 = arith.constant 0 : i32
    %c0_i32_1 = arith.constant 0 : i32
    return %c0_i32, %c0_i32_0 : i32, i32
  }
  func.func @transform_4(%arg0: i32) -> (i32, i32) {
    %c0_i32 = arith.constant 0 : i32
    %c0_i32_0 = arith.constant 0 : i32
    %c0_i32_1 = arith.constant 0 : i32
    return %c0_i32, %c0_i32_0 : i32, i32
  }
  func.func @transform_5(%arg0: i32) -> (i32, i32) {
    %c0_i32 = arith.constant 0 : i32
    %c0_i32_0 = arith.constant 0 : i32
    %c0_i32_1 = arith.constant 0 : i32
    return %c0_i32, %c0_i32_0 : i32, i32
  }
  func.func @transform_6(%arg0: i32) -> (i32, i32) {
    %c0_i32 = arith.constant 0 : i32
    %c0_i32_0 = arith.constant 0 : i32
    %c0_i32_1 = arith.constant 0 : i32
    return %c0_i32, %c0_i32_0 : i32, i32
  }
  func.func @transform_7(%arg0: i32) -> (i32, i32) {
    %c0_i32 = arith.constant 0 : i32
    %c0_i32_0 = arith.constant 0 : i32
    %c0_i32_1 = arith.constant 0 : i32
    return %c0_i32, %c0_i32_0 : i32, i32
  }
  func.func @transform_8(%arg0: i32) -> (i32, i32) {
    %c0_i32 = arith.constant 0 : i32
    %c0_i32_0 = arith.constant 0 : i32
    %c0_i32_1 = arith.constant 0 : i32
    return %c0_i32, %c0_i32_0 : i32, i32
  }
  func.func @transform_9(%arg0: i32) -> (i32, i32) {
    %c0_i32 = arith.constant 0 : i32
    %c0_i32_0 = arith.constant 0 : i32
    %c0_i32_1 = arith.constant 0 : i32
    return %c0_i32, %c0_i32_0 : i32, i32
  }
  func.func @transform_10(%arg0: i32) -> (i32, i32) {
    %c0_i32 = arith.constant 0 : i32
    %c0_i32_0 = arith.constant 0 : i32
    %c0_i32_1 = arith.constant 0 : i32
    return %c0_i32, %c0_i32_0 : i32, i32
  }
  func.func @transform_11(%arg0: i32) -> (i32, i32) {
    %c0_i32 = arith.constant 0 : i32
    %c0_i32_0 = arith.constant 0 : i32
    %c0_i32_1 = arith.constant 0 : i32
    return %c0_i32, %c0_i32_0 : i32, i32
  }
  func.func @transform_12(%arg0: i32) -> (i32, i32) {
    %c0_i32 = arith.constant 0 : i32
    %c0_i32_0 = arith.constant 0 : i32
    return %arg0, %c0_i32 : i32, i32
  }
}

</mosaic_0001>

<llo_original>
// kernel: tpu_custom_call.1
$region0: #{tpu_custom_call.1}
  #allocation0 [shape = 'u32[]', space=smem, size = 0x4, offset = 0x4, fixed_abs, tag = 'smem constant byte address 0x4 - core index']
  #allocation1 [shape = 'u32[144,128]{1,0:T(1,128)}', space=vmem, size = 0x12000, scoped, tag = 'internal scratch']
  %s0 = inlined_call_operand.hbm [shape: bf16[8,128], index: 0, kind: input, shape index: {}]
  %s1 = inlined_call_operand.hbm [shape: bf16[8,128], index: 1, kind: input, shape index: {}]
  %s2 = inlined_call_operand.hbm [shape: bf16[128,128], index: 2, kind: input, shape index: {}]
  %s3 = inlined_call_operand.vmem [shape: f32[1,128], index: 3, kind: input, shape index: {}]
  %s4 = inlined_call_operand.hbm [shape: bf16[128,128], index: 4, kind: input, shape index: {}]
  %s5 = inlined_call_operand.vmem [shape: f32[1,128], index: 5, kind: input, shape index: {}]
  %s6 = inlined_call_operand.hbm [shape: bf16[128,128], index: 6, kind: input, shape index: {}]
  %s7 = inlined_call_operand.vmem [shape: f32[1,128], index: 7, kind: input, shape index: {}]
  %s8 = inlined_call_operand.hbm [shape: bf16[128,128], index: 8, kind: input, shape index: {}]
  %s9 = inlined_call_operand.vmem [shape: f32[1,128], index: 9, kind: input, shape index: {}]
  %s10 = inlined_call_operand.hbm [shape: bf16[128,128], index: 10, kind: input, shape index: {}]
  %s11 = inlined_call_operand.vmem [shape: f32[1,128], index: 11, kind: input, shape index: {}]
  %s12 = inlined_call_operand.hbm [shape: f32[8,128], index: 12, kind: output, shape index: {}]
  %s13 = sld [smem:[#allocation0]]
  $region86: #{tpu_custom_call.1} parent=0
    _
  %s15 = ssub.s32 1, %s13
  %s16 = scalar_select 0, %s15, %s13
  $region1: #{tpu_custom_call.1} parent=0
    #allocation2 [shape = 'u8[2048]{0}', space=vmem, size = 0x800, scoped, tag = 'input window, operand 0, single buffered']
    #allocation3 [shape = 's32[1]{0}', space=sflag, size = 0x4, scoped, tag = 'scoped memory for tpu_custom_call.1']
    #allocation4 [shape = 's32[1]{0}', space=sflag, size = 0x4, scoped, tag = 'scoped memory for tpu_custom_call.1']
    #allocation5 [shape = 'u8[2048]{0}', space=vmem, size = 0x800, scoped, tag = 'input window, operand 1, single buffered']
    #allocation6 [shape = 's32[1]{0}', space=sflag, size = 0x4, scoped, tag = 'scoped memory for tpu_custom_call.1']
    #allocation7 [shape = 'u8[32768]{0}', space=vmem, size = 0x8000, scoped, tag = 'input window, operand 2, single buffered']
    #allocation8 [shape = 'u8[32768]{0}', space=vmem, size = 0x8000, scoped, tag = 'input window, operand 4, single buffered']
    #allocation9 [shape = 's32[1]{0}', space=sflag, size = 0x4, scoped, tag = 'scoped memory for tpu_custom_call.1']
    #allocation10 [shape = 'u8[32768]{0}', space=vmem, size = 0x8000, scoped, tag = 'input window, operand 6, single buffered']
    #allocation11 [shape = 'u8[32768]{0}', space=vmem, size = 0x8000, scoped, tag = 'input window, operand 8, single buffered']
    #allocation12 [shape = 's32[1]{0}', space=sflag, size = 0x4, scoped, tag = 'scoped memory for tpu_custom_call.1']
    #allocation13 [shape = 'u8[32768]{0}', space=vmem, size = 0x8000, scoped, tag = 'input window, operand 10, single buffered']
    #allocation14 [shape = 'u8[4096]{0}', space=vmem, size = 0x1000, scoped, tag = 'output window, operand 0, single buffered']
    %17 = vsyncpa [#allocation3], 0
    %18 = vsyncpa [#allocation6], 0
    %19 = vsyncpa [#allocation9], 0
    %20 = vsyncpa [#allocation12], 0
    %21 = vsyncpa [#allocation4], 0
    // Predicated region
    $region2: #{tpu_custom_call.1} parent=1 // pred_check
      _
    $region3: #{tpu_custom_call.1} parent=1 // pred_check_branch
      %23 = sbr.rel (0) target = $region5
    $region4: #{tpu_custom_call.1} parent=1 // pred_region
      %s25 = ssub.s32 64, 64
      %26 = vsyncadd [#allocation3], %s25
      %s28 = sshll.u32 [#allocation2], 4
      %s29 = int_to_ptr.vmem [resolvable:$true] %s28
      %31 = dma.hbm_to_vmem [thread:$0]  %s0, 64, %s29, [#allocation3]
    $region5: #{tpu_custom_call.1} parent=1 // pred_fallthru
      _
    // Predicated region
    $region6: #{tpu_custom_call.1} parent=1 // pred_check
      _
    $region7: #{tpu_custom_call.1} parent=1 // pred_check_branch
      %33 = sbr.rel (0) target = $region9
    $region8: #{tpu_custom_call.1} parent=1 // pred_region
      %s35 = ssub.s32 64, 64
      %36 = vsyncadd [#allocation6], %s35
      %s38 = sshll.u32 [#allocation5], 4
      %s39 = int_to_ptr.vmem [resolvable:$true] %s38
      %41 = dma.hbm_to_vmem [thread:$0]  %s1, 64, %s39, [#allocation6]
    $region9: #{tpu_custom_call.1} parent=1 // pred_fallthru
      _
    // Predicated region
    $region10: #{tpu_custom_call.1} parent=1 // pred_check
      _
    $region11: #{tpu_custom_call.1} parent=1 // pred_check_branch
      %43 = sbr.rel (0) target = $region13
    $region12: #{tpu_custom_call.1} parent=1 // pred_region
      %s45 = ssub.s32 1024, 1024
      %46 = vsyncadd [#allocation6], %s45
      %s47 = sshll.u32 [#allocation7], 4
      %s48 = int_to_ptr.vmem [resolvable:$true] %s47
      %53 = dma.hbm_to_vmem [thread:$0]  %s2, 1024, %s48, [#allocation6], 64, 64, 4
    $region13: #{tpu_custom_call.1} parent=1 // pred_fallthru
      _
    // Predicated region
    $region14: #{tpu_custom_call.1} parent=1 // pred_check
      _
    $region15: #{tpu_custom_call.1} parent=1 // pred_check_branch
      %55 = sbr.rel (0) target = $region17
    $region16: #{tpu_custom_call.1} parent=1 // pred_region
      _
    $region17: #{tpu_custom_call.1} parent=1 // pred_fallthru
      _
    // Predicated region
    $region18: #{tpu_custom_call.1} parent=1 // pred_check
      _
    $region19: #{tpu_custom_call.1} parent=1 // pred_check_branch
      %57 = sbr.rel (0) target = $region21
    $region20: #{tpu_custom_call.1} parent=1 // pred_region
      %s59 = ssub.s32 1024, 1024
      %60 = vsyncadd [#allocation9], %s59
      %s61 = sshll.u32 [#allocation8], 4
      %s62 = int_to_ptr.vmem [resolvable:$true] %s61
      %67 = dma.hbm_to_vmem [thread:$0]  %s4, 1024, %s62, [#allocation9], 64, 64, 4
    $region21: #{tpu_custom_call.1} parent=1 // pred_fallthru
      _
    // Predicated region
    $region22: #{tpu_custom_call.1} parent=1 // pred_check
      _
    $region23: #{tpu_custom_call.1} parent=1 // pred_check_branch
      %69 = sbr.rel (0) target = $region25
    $region24: #{tpu_custom_call.1} parent=1 // pred_region
      _
    $region25: #{tpu_custom_call.1} parent=1 // pred_fallthru
      _
    // Predicated region
    $region26: #{tpu_custom_call.1} parent=1 // pred_check
      _
    $region27: #{tpu_custom_call.1} parent=1 // pred_check_branch
      %71 = sbr.rel (0) target = $region29
    $region28: #{tpu_custom_call.1} parent=1 // pred_region
      %s73 = ssub.s32 1024, 1024
      %74 = vsyncadd [#allocation9], %s73
      %s75 = sshll.u32 [#allocation10], 4
      %s76 = int_to_ptr.vmem [resolvable:$true] %s75
      %81 = dma.hbm_to_vmem [thread:$0]  %s6, 1024, %s76, [#allocation9], 64, 64, 4
    $region29: #{tpu_custom_call.1} parent=1 // pred_fallthru
      _
    // Predicated region
    $region30: #{tpu_custom_call.1} parent=1 // pred_check
      _
    $region31: #{tpu_custom_call.1} parent=1 // pred_check_branch
      %83 = sbr.rel (0) target = $region33
    $region32: #{tpu_custom_call.1} parent=1 // pred_region
      _
    $region33: #{tpu_custom_call.1} parent=1 // pred_fallthru
      _
    // Predicated region
    $region34: #{tpu_custom_call.1} parent=1 // pred_check
      _
    $region35: #{tpu_custom_call.1} parent=1 // pred_check_branch
      %85 = sbr.rel (0) target = $region37
    $region36: #{tpu_custom_call.1} parent=1 // pred_region
      %s87 = ssub.s32 1024, 1024
      %88 = vsyncadd [#allocation12], %s87
      %s89 = sshll.u32 [#allocation11], 4
      %s90 = int_to_ptr.vmem [resolvable:$true] %s89
      %95 = dma.hbm_to_vmem [thread:$0]  %s8, 1024, %s90, [#allocation12], 64, 64, 4
    $region37: #{tpu_custom_call.1} parent=1 // pred_fallthru
      _
    // Predicated region
    $region38: #{tpu_custom_call.1} parent=1 // pred_check
      _
    $region39: #{tpu_custom_call.1} parent=1 // pred_check_branch
      %97 = sbr.rel (0) target = $region41
    $region40: #{tpu_custom_call.1} parent=1 // pred_region
      _
    $region41: #{tpu_custom_call.1} parent=1 // pred_fallthru
      _
    // Predicated region
    $region42: #{tpu_custom_call.1} parent=1 // pred_check
      _
    $region43: #{tpu_custom_call.1} parent=1 // pred_check_branch
      %99 = sbr.rel (0) target = $region45
    $region44: #{tpu_custom_call.1} parent=1 // pred_region
      %s101 = ssub.s32 1024, 1024
      %102 = vsyncadd [#allocation12], %s101
      %s103 = sshll.u32 [#allocation13], 4
      %s104 = int_to_ptr.vmem [resolvable:$true] %s103
      %109 = dma.hbm_to_vmem [thread:$0]  %s10, 1024, %s104, [#allocation12], 64, 64, 4
    $region45: #{tpu_custom_call.1} parent=1 // pred_fallthru
      _
    // Predicated region
    $region46: #{tpu_custom_call.1} parent=1 // pred_check
      _
    $region47: #{tpu_custom_call.1} parent=1 // pred_check_branch
      %111 = sbr.rel (0) target = $region49
    $region48: #{tpu_custom_call.1} parent=1 // pred_region
      _
    $region49: #{tpu_custom_call.1} parent=1 // pred_fallthru
      _
    // Predicated region
    $region50: #{tpu_custom_call.1} parent=1 // pred_check
      _
    $region51: #{tpu_custom_call.1} parent=1 // pred_check_branch
      %113 = sbr.rel (0) target = $region53
    $region52: #{tpu_custom_call.1} parent=1 // pred_region
      %114 = dma.done [#allocation3], 64
    $region53: #{tpu_custom_call.1} parent=1 // pred_fallthru
      _
    // Predicated region
    $region54: #{tpu_custom_call.1} parent=1 // pred_check
      _
    $region55: #{tpu_custom_call.1} parent=1 // pred_check_branch
      %116 = sbr.rel (0) target = $region57
    $region56: #{tpu_custom_call.1} parent=1 // pred_region
      %117 = dma.done [#allocation6], 64
    $region57: #{tpu_custom_call.1} parent=1 // pred_fallthru
      _
    // Predicated region
    $region58: #{tpu_custom_call.1} parent=1 // pred_check
      _
    $region59: #{tpu_custom_call.1} parent=1 // pred_check_branch
      %119 = sbr.rel (0) target = $region61
    $region60: #{tpu_custom_call.1} parent=1 // pred_region
      %120 = dma.done [#allocation6], 1024
    $region61: #{tpu_custom_call.1} parent=1 // pred_fallthru
      _
    // Predicated region
    $region62: #{tpu_custom_call.1} parent=1 // pred_check
      _
    $region63: #{tpu_custom_call.1} parent=1 // pred_check_branch
      %122 = sbr.rel (0) target = $region65
    $region64: #{tpu_custom_call.1} parent=1 // pred_region
      %123 = dma.done [#allocation9], 1024
    $region65: #{tpu_custom_call.1} parent=1 // pred_fallthru
      _
    // Predicated region
    $region66: #{tpu_custom_call.1} parent=1 // pred_check
      _
    $region67: #{tpu_custom_call.1} parent=1 // pred_check_branch
      %125 = sbr.rel (0) target = $region69
    $region68: #{tpu_custom_call.1} parent=1 // pred_region
      %126 = dma.done [#allocation9], 1024
    $region69: #{tpu_custom_call.1} parent=1 // pred_fallthru
      _
    // Predicated region
    $region70: #{tpu_custom_call.1} parent=1 // pred_check
      _
    $region71: #{tpu_custom_call.1} parent=1 // pred_check_branch
      %128 = sbr.rel (0) target = $region73
    $region72: #{tpu_custom_call.1} parent=1 // pred_region
      %129 = dma.done [#allocation12], 1024
    $region73: #{tpu_custom_call.1} parent=1 // pred_fallthru
      _
    // Predicated region
    $region74: #{tpu_custom_call.1} parent=1 // pred_check
      _
    $region75: #{tpu_custom_call.1} parent=1 // pred_check_branch
      %131 = sbr.rel (0) target = $region77
    $region76: #{tpu_custom_call.1} parent=1 // pred_region
      %132 = dma.done [#allocation12], 1024
    $region77: #{tpu_custom_call.1} parent=1 // pred_fallthru
      _
    %v134 = vld [vmem:[#allocation2] sm:$0xf]
    %v135 = vld [vmem:[#allocation5] sm:$0xf]
    %v136 = vld [vmem:[%s3] sm:$0x1]
    %v137 = vld [vmem:[%s5] sm:$0x1]
    %v138 = vld [vmem:[%s7] sm:$0x1]
    %v139 = vld [vmem:[%s9] sm:$0x1]
    %v140 = vld [vmem:[%s11] sm:$0x1]
    %v141 = vld [vmem:[#allocation7] sm:$0xf]
    %v142 = vld [vmem:[#allocation7 + $0x4] sm:$0xf]
    %v143 = vld [vmem:[#allocation7 + $0x8] sm:$0xf]
    %v144 = vld [vmem:[#allocation7 + $0xc] sm:$0xf]
    %v145 = vld [vmem:[#allocation7 + $0x10] sm:$0xf]
    %v146 = vld [vmem:[#allocation7 + $0x14] sm:$0xf]
    %v147 = vld [vmem:[#allocation7 + $0x18] sm:$0xf]
    %v148 = vld [vmem:[#allocation7 + $0x1c] sm:$0xf]
    %v149 = vld [vmem:[#allocation7 + $0x20] sm:$0xf]
    %v150 = vld [vmem:[#allocation7 + $0x24] sm:$0xf]
    %v151 = vld [vmem:[#allocation7 + $0x28] sm:$0xf]
    %v152 = vld [vmem:[#allocation7 + $0x2c] sm:$0xf]
    %v153 = vld [vmem:[#allocation7 + $0x30] sm:$0xf]
    %v154 = vld [vmem:[#allocation7 + $0x34] sm:$0xf]
    %v155 = vld [vmem:[#allocation7 + $0x38] sm:$0xf]
    %v156 = vld [vmem:[#allocation7 + $0x3c] sm:$0xf]
    %v158 = vlaneseq
    %v159 = vshrl.u32 %v158, 7
    %v160 = vsub.s32 0, %v159
    %v161 = vrot.slane %v136, %v160
    %v179 = vunpack.c.l.b16 %v141
    %v180 = vunpack.c.l.b16 %v142
    %v181 = vunpack.c.l.b16 %v143
    %v182 = vunpack.c.l.b16 %v144
    %v183 = vunpack.c.l.b16 %v145
    %v184 = vunpack.c.l.b16 %v146
    %v185 = vunpack.c.l.b16 %v147
    %v186 = vunpack.c.l.b16 %v148
    %v187 = vunpack.c.l.b16 %v149
    %v188 = vunpack.c.l.b16 %v150
    %v189 = vunpack.c.l.b16 %v151
    %v190 = vunpack.c.l.b16 %v152
    %v191 = vunpack.c.l.b16 %v153
    %v192 = vunpack.c.l.b16 %v154
    %v193 = vunpack.c.l.b16 %v155
    %v194 = vunpack.c.l.b16 %v156
    %v195 = vpack.c.b16 %v180, %v179
    %v196 = vpack.c.b16 %v182, %v181
    %v197 = vpack.c.b16 %v184, %v183
    %v198 = vpack.c.b16 %v186, %v185
    %v199 = vpack.c.b16 %v188, %v187
    %v200 = vpack.c.b16 %v190, %v189
    %v201 = vpack.c.b16 %v192, %v191
    %v202 = vpack.c.b16 %v194, %v193
    %211 = vmatprep.subr.bf16.mxu0 0
    %212 = vmatpush1.bf16.msra.mxu0 %v195
    %213 = vmatprep.subr.bf16.mxu0 0
    %214 = vmatpush1.bf16.msra.mxu0 %v196
    %215 = vmatprep.subr.bf16.mxu0 0
    %216 = vmatpush1.bf16.msra.mxu0 %v197
    %217 = vmatprep.subr.bf16.mxu0 0
    %218 = vmatpush1.bf16.msra.mxu0 %v198
    %219 = vmatprep.subr.bf16.mxu0 0
    %220 = vmatpush1.bf16.msra.mxu0 %v199
    %221 = vmatprep.subr.bf16.mxu0 0
    %222 = vmatpush1.bf16.msra.mxu0 %v200
    %223 = vmatprep.subr.bf16.mxu0 0
    %224 = vmatpush1.bf16.msra.mxu0 %v201
    %225 = vmatprep.subr.bf16.mxu0 0
    %226 = vmatpush1.bf16.msra.mxu0 %v202
    %227 = vmatprep.subr.bf16.mxu0 0
    %228 = vmatpush1.bf16.msra.mxu0 0
    %229 = vmatprep.subr.bf16.mxu0 0
    %230 = vmatpush1.bf16.msra.mxu0 0
    %231 = vmatprep.subr.bf16.mxu0 0
    %232 = vmatpush1.bf16.msra.mxu0 0
    %233 = vmatprep.subr.bf16.mxu0 0
    %234 = vmatpush1.bf16.msra.mxu0 0
    %235 = vmatprep.subr.bf16.mxu0 0
    %236 = vmatpush1.bf16.msra.mxu0 0
    %237 = vmatprep.subr.bf16.mxu0 0
    %238 = vmatpush1.bf16.msra.mxu0 0
    %239 = vmatprep.subr.bf16.mxu0 0
    %240 = vmatpush1.bf16.msra.mxu0 0
    %241 = vmatprep.subr.bf16.mxu0 0
    %242 = vmatpush1.bf16.msra.mxu0 0
    %243 = vmatprep.mubr.bf16.mxu0 0
    %244 = vmatmul.mubr.bf16.gmra.mrb[0].mxu0 %v134
    %v245 = vpop.f32.mrb[0].mxu0
    %v246 = vadd.f32 %v161, %v245
    %v247 = vpop.f32.mrb[0].mxu0
    %v248 = vpop.f32.mrb[0].mxu0
    %v249 = vpop.f32.mrb[0].mxu0
    %250 = vdwg.mxu0
    %v251 = vsub.f32 0.0, %v246
    %v252 = vmul.f32 %v251, 1.442695
    %v253 = vpow.pop %v252
    %v254 = vadd.f32 %v253, 1.0
    %v255 = vrcp.pop %v254
    %v256 = vpack.c.bf16 %v255, %v255
    %v257 = vld [vmem:[#allocation8] sm:$0xf]
    %v258 = vld [vmem:[#allocation8 + $0x4] sm:$0xf]
    %v259 = vld [vmem:[#allocation8 + $0x8] sm:$0xf]
    %v260 = vld [vmem:[#allocation8 + $0xc] sm:$0xf]
    %v261 = vld [vmem:[#allocation8 + $0x10] sm:$0xf]
    %v262 = vld [vmem:[#allocation8 + $0x14] sm:$0xf]
    %v263 = vld [vmem:[#allocation8 + $0x18] sm:$0xf]
    %v264 = vld [vmem:[#allocation8 + $0x1c] sm:$0xf]
    %v265 = vld [vmem:[#allocation8 + $0x20] sm:$0xf]
    %v266 = vld [vmem:[#allocation8 + $0x24] sm:$0xf]
    %v267 = vld [vmem:[#allocation8 + $0x28] sm:$0xf]
    %v268 = vld [vmem:[#allocation8 + $0x2c] sm:$0xf]
    %v269 = vld [vmem:[#allocation8 + $0x30] sm:$0xf]
    %v270 = vld [vmem:[#allocation8 + $0x34] sm:$0xf]
    %v271 = vld [vmem:[#allocation8 + $0x38] sm:$0xf]
    %v272 = vld [vmem:[#allocation8 + $0x3c] sm:$0xf]
    %v274 = vlaneseq
    %v275 = vshrl.u32 %v274, 7
    %v276 = vsub.s32 0, %v275
    %v277 = vrot.slane %v137, %v276
    %v295 = vunpack.c.l.b16 %v257
    %v296 = vunpack.c.l.b16 %v258
    %v297 = vunpack.c.l.b16 %v259
    %v298 = vunpack.c.l.b16 %v260
    %v299 = vunpack.c.l.b16 %v261
    %v300 = vunpack.c.l.b16 %v262
    %v301 = vunpack.c.l.b16 %v263
    %v302 = vunpack.c.l.b16 %v264
    %v303 = vunpack.c.l.b16 %v265
    %v304 = vunpack.c.l.b16 %v266
    %v305 = vunpack.c.l.b16 %v267
    %v306 = vunpack.c.l.b16 %v268
    %v307 = vunpack.c.l.b16 %v269
    %v308 = vunpack.c.l.b16 %v270
    %v309 = vunpack.c.l.b16 %v271
    %v310 = vunpack.c.l.b16 %v272
    %v311 = vpack.c.b16 %v296, %v295
    %v312 = vpack.c.b16 %v298, %v297
    %v313 = vpack.c.b16 %v300, %v299
    %v314 = vpack.c.b16 %v302, %v301
    %v315 = vpack.c.b16 %v304, %v303
    %v316 = vpack.c.b16 %v306, %v305
    %v317 = vpack.c.b16 %v308, %v307
    %v318 = vpack.c.b16 %v310, %v309
    %327 = vmatprep.subr.bf16.mxu0 0
    %328 = vmatpush1.bf16.msra.mxu0 %v311
    %329 = vmatprep.subr.bf16.mxu0 0
    %330 = vmatpush1.bf16.msra.mxu0 %v312
    %331 = vmatprep.subr.bf16.mxu0 0
    %332 = vmatpush1.bf16.msra.mxu0 %v313
    %333 = vmatprep.subr.bf16.mxu0 0
    %334 = vmatpush1.bf16.msra.mxu0 %v314
    %335 = vmatprep.subr.bf16.mxu0 0
    %336 = vmatpush1.bf16.msra.mxu0 %v315
    %337 = vmatprep.subr.bf16.mxu0 0
    %338 = vmatpush1.bf16.msra.mxu0 %v316
    %339 = vmatprep.subr.bf16.mxu0 0
    %340 = vmatpush1.bf16.msra.mxu0 %v317
    %341 = vmatprep.subr.bf16.mxu0 0
    %342 = vmatpush1.bf16.msra.mxu0 %v318
    %343 = vmatprep.subr.bf16.mxu0 0
    %344 = vmatpush1.bf16.msra.mxu0 0
    %345 = vmatprep.subr.bf16.mxu0 0
    %346 = vmatpush1.bf16.msra.mxu0 0
    %347 = vmatprep.subr.bf16.mxu0 0
    %348 = vmatpush1.bf16.msra.mxu0 0
    %349 = vmatprep.subr.bf16.mxu0 0
    %350 = vmatpush1.bf16.msra.mxu0 0
    %351 = vmatprep.subr.bf16.mxu0 0
    %352 = vmatpush1.bf16.msra.mxu0 0
    %353 = vmatprep.subr.bf16.mxu0 0
    %354 = vmatpush1.bf16.msra.mxu0 0
    %355 = vmatprep.subr.bf16.mxu0 0
    %356 = vmatpush1.bf16.msra.mxu0 0
    %357 = vmatprep.subr.bf16.mxu0 0
    %358 = vmatpush1.bf16.msra.mxu0 0
    %359 = vmatprep.mubr.bf16.mxu0 0
    %360 = vmatmul.mubr.bf16.gmra.mrb[0].mxu0 %v256
    %v361 = vpop.f32.mrb[0].mxu0
    %v362 = vadd.f32 %v277, %v361
    %v363 = vpop.f32.mrb[0].mxu0
    %v364 = vpop.f32.mrb[0].mxu0
    %v365 = vpop.f32.mrb[0].mxu0
    %366 = vdwg.mxu0
    %v367 = vunpack.c.l.bf16 %v135
    %v368 = vsub.f32 0.0, %v367
    %v369 = vmul.f32 %v368, 1.442695
    %v370 = vpow.pop %v369
    %v371 = vadd.f32 %v370, 1.0
    %v372 = vrcp.pop %v371
    %v373 = vmul.f32 %v367, %v372
    %v374 = vpack.c.bf16 %v373, %v373
    %v375 = vld [vmem:[#allocation10] sm:$0xf]
    %v376 = vld [vmem:[#allocation10 + $0x4] sm:$0xf]
    %v377 = vld [vmem:[#allocation10 + $0x8] sm:$0xf]
    %v378 = vld [vmem:[#allocation10 + $0xc] sm:$0xf]
    %v379 = vld [vmem:[#allocation10 + $0x10] sm:$0xf]
    %v380 = vld [vmem:[#allocation10 + $0x14] sm:$0xf]
    %v381 = vld [vmem:[#allocation10 + $0x18] sm:$0xf]
    %v382 = vld [vmem:[#allocation10 + $0x1c] sm:$0xf]
    %v383 = vld [vmem:[#allocation10 + $0x20] sm:$0xf]
    %v384 = vld [vmem:[#allocation10 + $0x24] sm:$0xf]
    %v385 = vld [vmem:[#allocation10 + $0x28] sm:$0xf]
    %v386 = vld [vmem:[#allocation10 + $0x2c] sm:$0xf]
    %v387 = vld [vmem:[#allocation10 + $0x30] sm:$0xf]
    %v388 = vld [vmem:[#allocation10 + $0x34] sm:$0xf]
    %v389 = vld [vmem:[#allocation10 + $0x38] sm:$0xf]
    %v390 = vld [vmem:[#allocation10 + $0x3c] sm:$0xf]
    %v392 = vlaneseq
    %v393 = vshrl.u32 %v392, 7
    %v394 = vsub.s32 0, %v393
    %v395 = vrot.slane %v138, %v394
    %v413 = vunpack.c.l.b16 %v375
    %v414 = vunpack.c.l.b16 %v376
    %v415 = vunpack.c.l.b16 %v377
    %v416 = vunpack.c.l.b16 %v378
    %v417 = vunpack.c.l.b16 %v379
    %v418 = vunpack.c.l.b16 %v380
    %v419 = vunpack.c.l.b16 %v381
    %v420 = vunpack.c.l.b16 %v382
    %v421 = vunpack.c.l.b16 %v383
    %v422 = vunpack.c.l.b16 %v384
    %v423 = vunpack.c.l.b16 %v385
    %v424 = vunpack.c.l.b16 %v386
    %v425 = vunpack.c.l.b16 %v387
    %v426 = vunpack.c.l.b16 %v388
    %v427 = vunpack.c.l.b16 %v389
    %v428 = vunpack.c.l.b16 %v390
    %v429 = vpack.c.b16 %v414, %v413
    %v430 = vpack.c.b16 %v416, %v415
    %v431 = vpack.c.b16 %v418, %v417
    %v432 = vpack.c.b16 %v420, %v419
    %v433 = vpack.c.b16 %v422, %v421
    %v434 = vpack.c.b16 %v424, %v423
    %v435 = vpack.c.b16 %v426, %v425
    %v436 = vpack.c.b16 %v428, %v427
    %445 = vmatprep.subr.bf16.mxu0 0
    %446 = vmatpush1.bf16.msra.mxu0 %v429
    %447 = vmatprep.subr.bf16.mxu0 0
    %448 = vmatpush1.bf16.msra.mxu0 %v430
    %449 = vmatprep.subr.bf16.mxu0 0
    %450 = vmatpush1.bf16.msra.mxu0 %v431
    %451 = vmatprep.subr.bf16.mxu0 0
    %452 = vmatpush1.bf16.msra.mxu0 %v432
    %453 = vmatprep.subr.bf16.mxu0 0
    %454 = vmatpush1.bf16.msra.mxu0 %v433
    %455 = vmatprep.subr.bf16.mxu0 0
    %456 = vmatpush1.bf16.msra.mxu0 %v434
    %457 = vmatprep.subr.bf16.mxu0 0
    %458 = vmatpush1.bf16.msra.mxu0 %v435
    %459 = vmatprep.subr.bf16.mxu0 0
    %460 = vmatpush1.bf16.msra.mxu0 %v436
    %461 = vmatprep.subr.bf16.mxu0 0
    %462 = vmatpush1.bf16.msra.mxu0 0
    %463 = vmatprep.subr.bf16.mxu0 0
    %464 = vmatpush1.bf16.msra.mxu0 0
    %465 = vmatprep.subr.bf16.mxu0 0
    %466 = vmatpush1.bf16.msra.mxu0 0
    %467 = vmatprep.subr.bf16.mxu0 0
    %468 = vmatpush1.bf16.msra.mxu0 0
    %469 = vmatprep.subr.bf16.mxu0 0
    %470 = vmatpush1.bf16.msra.mxu0 0
    %471 = vmatprep.subr.bf16.mxu0 0
    %472 = vmatpush1.bf16.msra.mxu0 0
    %473 = vmatprep.subr.bf16.mxu0 0
    %474 = vmatpush1.bf16.msra.mxu0 0
    %475 = vmatprep.subr.bf16.mxu0 0
    %476 = vmatpush1.bf16.msra.mxu0 0
    %477 = vmatprep.mubr.bf16.mxu0 0
    %478 = vmatmul.mubr.bf16.gmra.mrb[0].mxu0 %v374
    %v479 = vpop.f32.mrb[0].mxu0
    %v480 = vadd.f32 %v395, %v479
    %v481 = vpop.f32.mrb[0].mxu0
    %v482 = vpop.f32.mrb[0].mxu0
    %v483 = vpop.f32.mrb[0].mxu0
    %484 = vdwg.mxu0
    %v485 = vadd.f32 %v362, %v480
    %v486 = vsub.f32 0.0, %v485
    %v487 = vmul.f32 %v486, 1.442695
    %v488 = vpow.pop %v487
    %v489 = vadd.f32 %v488, 1.0
    %v490 = vrcp.pop %v489
    %v491 = vpack.c.bf16 %v490, %v490
    %v492 = vld [vmem:[#allocation11] sm:$0xf]
    %v493 = vld [vmem:[#allocation11 + $0x4] sm:$0xf]
    %v494 = vld [vmem:[#allocation11 + $0x8] sm:$0xf]
    %v495 = vld [vmem:[#allocation11 + $0xc] sm:$0xf]
    %v496 = vld [vmem:[#allocation11 + $0x10] sm:$0xf]
    %v497 = vld [vmem:[#allocation11 + $0x14] sm:$0xf]
    %v498 = vld [vmem:[#allocation11 + $0x18] sm:$0xf]
    %v499 = vld [vmem:[#allocation11 + $0x1c] sm:$0xf]
    %v500 = vld [vmem:[#allocation11 + $0x20] sm:$0xf]
    %v501 = vld [vmem:[#allocation11 + $0x24] sm:$0xf]
    %v502 = vld [vmem:[#allocation11 + $0x28] sm:$0xf]
    %v503 = vld [vmem:[#allocation11 + $0x2c] sm:$0xf]
    %v504 = vld [vmem:[#allocation11 + $0x30] sm:$0xf]
    %v505 = vld [vmem:[#allocation11 + $0x34] sm:$0xf]
    %v506 = vld [vmem:[#allocation11 + $0x38] sm:$0xf]
    %v507 = vld [vmem:[#allocation11 + $0x3c] sm:$0xf]
    %v509 = vlaneseq
    %v510 = vshrl.u32 %v509, 7
    %v511 = vsub.s32 0, %v510
    %v512 = vrot.slane %v139, %v511
    %v530 = vunpack.c.l.b16 %v492
    %v531 = vunpack.c.l.b16 %v493
    %v532 = vunpack.c.l.b16 %v494
    %v533 = vunpack.c.l.b16 %v495
    %v534 = vunpack.c.l.b16 %v496
    %v535 = vunpack.c.l.b16 %v497
    %v536 = vunpack.c.l.b16 %v498
    %v537 = vunpack.c.l.b16 %v499
    %v538 = vunpack.c.l.b16 %v500
    %v539 = vunpack.c.l.b16 %v501
    %v540 = vunpack.c.l.b16 %v502
    %v541 = vunpack.c.l.b16 %v503
    %v542 = vunpack.c.l.b16 %v504
    %v543 = vunpack.c.l.b16 %v505
    %v544 = vunpack.c.l.b16 %v506
    %v545 = vunpack.c.l.b16 %v507
    %v546 = vpack.c.b16 %v531, %v530
    %v547 = vpack.c.b16 %v533, %v532
    %v548 = vpack.c.b16 %v535, %v534
    %v549 = vpack.c.b16 %v537, %v536
    %v550 = vpack.c.b16 %v539, %v538
    %v551 = vpack.c.b16 %v541, %v540
    %v552 = vpack.c.b16 %v543, %v542
    %v553 = vpack.c.b16 %v545, %v544
    %562 = vmatprep.subr.bf16.mxu0 0
    %563 = vmatpush1.bf16.msra.mxu0 %v546
    %564 = vmatprep.subr.bf16.mxu0 0
    %565 = vmatpush1.bf16.msra.mxu0 %v547
    %566 = vmatprep.subr.bf16.mxu0 0
    %567 = vmatpush1.bf16.msra.mxu0 %v548
    %568 = vmatprep.subr.bf16.mxu0 0
    %569 = vmatpush1.bf16.msra.mxu0 %v549
    %570 = vmatprep.subr.bf16.mxu0 0
    %571 = vmatpush1.bf16.msra.mxu0 %v550
    %572 = vmatprep.subr.bf16.mxu0 0
    %573 = vmatpush1.bf16.msra.mxu0 %v551
    %574 = vmatprep.subr.bf16.mxu0 0
    %575 = vmatpush1.bf16.msra.mxu0 %v552
    %576 = vmatprep.subr.bf16.mxu0 0
    %577 = vmatpush1.bf16.msra.mxu0 %v553
    %578 = vmatprep.subr.bf16.mxu0 0
    %579 = vmatpush1.bf16.msra.mxu0 0
    %580 = vmatprep.subr.bf16.mxu0 0
    %581 = vmatpush1.bf16.msra.mxu0 0
    %582 = vmatprep.subr.bf16.mxu0 0
    %583 = vmatpush1.bf16.msra.mxu0 0
    %584 = vmatprep.subr.bf16.mxu0 0
    %585 = vmatpush1.bf16.msra.mxu0 0
    %586 = vmatprep.subr.bf16.mxu0 0
    %587 = vmatpush1.bf16.msra.mxu0 0
    %588 = vmatprep.subr.bf16.mxu0 0
    %589 = vmatpush1.bf16.msra.mxu0 0
    %590 = vmatprep.subr.bf16.mxu0 0
    %591 = vmatpush1.bf16.msra.mxu0 0
    %592 = vmatprep.subr.bf16.mxu0 0
    %593 = vmatpush1.bf16.msra.mxu0 0
    %594 = vmatprep.mubr.bf16.mxu0 0
    %595 = vmatmul.mubr.bf16.gmra.mrb[0].mxu0 %v491
    %v596 = vpop.f32.mrb[0].mxu0
    %v597 = vadd.f32 %v512, %v596
    %v598 = vpop.f32.mrb[0].mxu0
    %v599 = vpop.f32.mrb[0].mxu0
    %v600 = vpop.f32.mrb[0].mxu0
    %601 = vdwg.mxu0
    %v602 = vsub.f32 0.0, %v597
    %v603 = vmul.f32 %v602, 1.442695
    %v604 = vpow.pop %v603
    %v605 = vadd.f32 %v604, 1.0
    %v606 = vrcp.pop %v605
    %v607 = vpack.c.bf16 %v606, %v606
    %v608 = vld [vmem:[#allocation13] sm:$0xf]
    %v609 = vld [vmem:[#allocation13 + $0x4] sm:$0xf]
    %v610 = vld [vmem:[#allocation13 + $0x8] sm:$0xf]
    %v611 = vld [vmem:[#allocation13 + $0xc] sm:$0xf]
    %v612 = vld [vmem:[#allocation13 + $0x10] sm:$0xf]
    %v613 = vld [vmem:[#allocation13 + $0x14] sm:$0xf]
    %v614 = vld [vmem:[#allocation13 + $0x18] sm:$0xf]
    %v615 = vld [vmem:[#allocation13 + $0x1c] sm:$0xf]
    %v616 = vld [vmem:[#allocation13 + $0x20] sm:$0xf]
    %v617 = vld [vmem:[#allocation13 + $0x24] sm:$0xf]
    %v618 = vld [vmem:[#allocation13 + $0x28] sm:$0xf]
    %v619 = vld [vmem:[#allocation13 + $0x2c] sm:$0xf]
    %v620 = vld [vmem:[#allocation13 + $0x30] sm:$0xf]
    %v621 = vld [vmem:[#allocation13 + $0x34] sm:$0xf]
    %v622 = vld [vmem:[#allocation13 + $0x38] sm:$0xf]
    %v623 = vld [vmem:[#allocation13 + $0x3c] sm:$0xf]
    %v625 = vlaneseq
    %v626 = vshrl.u32 %v625, 7
    %v627 = vsub.s32 0, %v626
    %v628 = vrot.slane %v140, %v627
    %v646 = vunpack.c.l.b16 %v608
    %v647 = vunpack.c.l.b16 %v609
    %v648 = vunpack.c.l.b16 %v610
    %v649 = vunpack.c.l.b16 %v611
    %v650 = vunpack.c.l.b16 %v612
    %v651 = vunpack.c.l.b16 %v613
    %v652 = vunpack.c.l.b16 %v614
    %v653 = vunpack.c.l.b16 %v615
    %v654 = vunpack.c.l.b16 %v616
    %v655 = vunpack.c.l.b16 %v617
    %v656 = vunpack.c.l.b16 %v618
    %v657 = vunpack.c.l.b16 %v619
    %v658 = vunpack.c.l.b16 %v620
    %v659 = vunpack.c.l.b16 %v621
    %v660 = vunpack.c.l.b16 %v622
    %v661 = vunpack.c.l.b16 %v623
    %v662 = vpack.c.b16 %v647, %v646
    %v663 = vpack.c.b16 %v649, %v648
    %v664 = vpack.c.b16 %v651, %v650
    %v665 = vpack.c.b16 %v653, %v652
    %v666 = vpack.c.b16 %v655, %v654
    %v667 = vpack.c.b16 %v657, %v656
    %v668 = vpack.c.b16 %v659, %v658
    %v669 = vpack.c.b16 %v661, %v660
    %678 = vmatprep.subr.bf16.mxu0 0
    %679 = vmatpush1.bf16.msra.mxu0 %v662
    %680 = vmatprep.subr.bf16.mxu0 0
    %681 = vmatpush1.bf16.msra.mxu0 %v663
    %682 = vmatprep.subr.bf16.mxu0 0
    %683 = vmatpush1.bf16.msra.mxu0 %v664
    %684 = vmatprep.subr.bf16.mxu0 0
    %685 = vmatpush1.bf16.msra.mxu0 %v665
    %686 = vmatprep.subr.bf16.mxu0 0
    %687 = vmatpush1.bf16.msra.mxu0 %v666
    %688 = vmatprep.subr.bf16.mxu0 0
    %689 = vmatpush1.bf16.msra.mxu0 %v667
    %690 = vmatprep.subr.bf16.mxu0 0
    %691 = vmatpush1.bf16.msra.mxu0 %v668
    %692 = vmatprep.subr.bf16.mxu0 0
    %693 = vmatpush1.bf16.msra.mxu0 %v669
    %694 = vmatprep.subr.bf16.mxu0 0
    %695 = vmatpush1.bf16.msra.mxu0 0
    %696 = vmatprep.subr.bf16.mxu0 0
    %697 = vmatpush1.bf16.msra.mxu0 0
    %698 = vmatprep.subr.bf16.mxu0 0
    %699 = vmatpush1.bf16.msra.mxu0 0
    %700 = vmatprep.subr.bf16.mxu0 0
    %701 = vmatpush1.bf16.msra.mxu0 0
    %702 = vmatprep.subr.bf16.mxu0 0
    %703 = vmatpush1.bf16.msra.mxu0 0
    %704 = vmatprep.subr.bf16.mxu0 0
    %705 = vmatpush1.bf16.msra.mxu0 0
    %706 = vmatprep.subr.bf16.mxu0 0
    %707 = vmatpush1.bf16.msra.mxu0 0
    %708 = vmatprep.subr.bf16.mxu0 0
    %709 = vmatpush1.bf16.msra.mxu0 0
    %710 = vmatprep.mubr.bf16.mxu0 0
    %711 = vmatmul.mubr.bf16.gmra.mrb[0].mxu0 %v607
    %v712 = vpop.f32.mrb[0].mxu0
    %v713 = vadd.f32 %v628, %v712
    %v714 = vpop.f32.mrb[0].mxu0
    %v715 = vpop.f32.mrb[0].mxu0
    %v716 = vpop.f32.mrb[0].mxu0
    %717 = vdwg.mxu0
    %718 = vst [vmem:[#allocation14] sm:$0xff] %v713
    // Predicated region
    $region78: #{tpu_custom_call.1} parent=1 // pred_check
      _
    $region79: #{tpu_custom_call.1} parent=1 // pred_check_branch
      %720 = sbr.rel (0) target = $region81
    $region80: #{tpu_custom_call.1} parent=1 // pred_region
      %s722 = ssub.s32 128, 128
      %723 = vsyncadd [#allocation4], %s722
      %s725 = sshll.u32 [#allocation14], 4
      %s726 = int_to_ptr.vmem [resolvable:$true] %s725
      %728 = dma.vmem_to_hbm [thread:$0]  %s726, 128, %s12, [#allocation4]
    $region81: #{tpu_custom_call.1} parent=1 // pred_fallthru
      _
    // Predicated region
    $region82: #{tpu_custom_call.1} parent=1 // pred_check
      _
    $region83: #{tpu_custom_call.1} parent=1 // pred_check_branch
      %730 = sbr.rel (0) target = $region85
    $region84: #{tpu_custom_call.1} parent=1 // pred_region
      %731 = dma.done [#allocation4], 128
    $region85: #{tpu_custom_call.1} parent=1 // pred_fallthru
      _
    %732 = vsyncpa [#allocation3], 1
    %733 = vsyncpa [#allocation6], 1
    %734 = vsyncpa [#allocation9], 1
    %735 = vsyncpa [#allocation12], 1
    %736 = vsyncpa [#allocation4], 1

</llo_original>
